<compile_context>
chip_gen: v6e
topology: v6e:2x2x1
jax: 0.10.0
libtpu: 0.0.40
codegen_flags: <defaults>
</compile_context>

<pallas_src>
import functools

import jax
import jax.numpy as jnp
from jax.experimental import pallas as pl
from jax.experimental.pallas import tpu as pltpu

LANE = 128


def _smpred_kernel(x_ref, wt_ref, z_ref, s_ref, loss_ref, m_sc, l_sc,
                   *, n_words, label_smoothing):
    """Grid = (row tiles, vocab tiles); vocab axis (axis 1) is the reduction axis."""
    j = pl.program_id(1)

    @pl.when(j == 0)
    def _():
        m_sc[...] = jnp.full_like(m_sc, -jnp.inf)
        l_sc[...] = jnp.zeros_like(l_sc)

    # (tn, D) bf16 @ (D, tv) bf16 -> (tn, tv) f32 on the MXU (NN form, no transpose).
    logits = jnp.dot(x_ref[...], wt_ref[...], preferred_element_type=jnp.float32)
    tv = logits.shape[-1]
    n_chunks = tv // LANE

    # Lane-wide online logsumexp: keep 128 per-lane running (max, sum) per row.
    # 128-aligned static slices of the logits tile -> pure VPU max/add + EUP exp in the
    # inner loop; no XLU cross-lane reduce until the epilogue.
    m_old = m_sc[...]                                   # (tn, 128)
    m_new = m_old
    for c in range(n_chunks):
        m_new = jnp.maximum(m_new, logits[:, c * LANE:(c + 1) * LANE])
    acc = l_sc[...] * jnp.exp(m_old - m_new)
    for c in range(n_chunks):
        acc = acc + jnp.exp(logits[:, c * LANE:(c + 1) * LANE] - m_new)
    l_sc[...] = acc
    m_sc[...] = m_new

    @pl.when(j == pl.num_programs(1) - 1)
    def _():
        # Single cross-lane (XLU) combine of the lane-wide accumulators.
        m_lane = m_sc[...]                              # (tn, 128)
        l_lane = l_sc[...]
        m_row = jnp.max(m_lane, axis=-1, keepdims=True)                     # (tn, 1)
        l_row = jnp.sum(l_lane * jnp.exp(m_lane - m_row), axis=-1, keepdims=True)
        lse = m_row + jnp.log(l_row)                    # (tn, 1)
        nll = lse - z_ref[...]                          # -log p(y)
        smooth = n_words * lse - s_ref[...]             # sum_v -log p_v
        eps = label_smoothing
        loss_ref[...] = (1.0 - eps) * nll + (eps / n_words) * smooth


def _default_config():
    """Per-generation tile / VMEM defaults (clamped to the problem size later)."""
    kind = ""
    try:
        kind = jax.devices()[0].device_kind.lower()
    except Exception:
        pass
    if "v7" in kind:
        # 64 MiB physical VMEM, 2 TCs/chip.
        # TODO(synk): pipeline_mode=pl.Buffered(1) on the x BlockSpec (x only changes on
        # the row axis) would free tn*D*2 bytes and allow tv=1024 on v7x.
        return dict(tn=1024, tv=512, vmem_limit_bytes=48 * (1 << 20), two_cores=True)
    if "v6" in kind:
        return dict(tn=1024, tv=1024, vmem_limit_bytes=96 * (1 << 20), two_cores=False)
    if "v5e" in kind or "v5 lite" in kind or "v5lite" in kind:
        # v5e is already roofline-balanced around tn=256; spend VMEM on tv instead.
        return dict(tn=256, tv=1024, vmem_limit_bytes=64 * (1 << 20), two_cores=False)
    # Unknown generation: conservative tiles, default scoped VMEM limit.
    return dict(tn=512, tv=512, vmem_limit_bytes=None, two_cores=False)


def prepare_weights(weight):
    """One-time weight-side preprocessing; hoist out of the jitted training step when
    the projection weight is reused across steps (removes ~V*D*6 bytes/call of HBM
    traffic from the hot path)."""
    wtb = weight.T.astype(jnp.bfloat16)                                   # (D, V) bf16
    colsum = jnp.sum(weight.astype(jnp.bfloat16).astype(jnp.float32),
                     axis=0, keepdims=True).T                             # (D, 1) f32
    return wtb, colsum


def smpred_loss(x, weight, y, *, label_smoothing, tn=None, tv=None,
                vmem_limit_bytes=None, prepared=None):
    """x: (N, D) f32, weight: (V, D) f32 (PyTorch layout), y: (N,) int -> scalar loss."""
    N, D = x.shape
    V, D2 = weight.shape
    assert D == D2

    cfg = _default_config()
    if tn is None:
        tn = cfg["tn"]
    if tv is None:
        tv = cfg["tv"]
    if vmem_limit_bytes is None:
        vmem_limit_bytes = cfg["vmem_limit_bytes"]

    tn = min(tn, N)
    tv = min(tv, V)
    # On 2-TC chips make sure both cores get at least one row tile.
    if cfg.get("two_cores") and N // tn < 2:
        half = N // 2
        if half >= 8 and half % 8 == 0 and N % half == 0:
            tn = min(tn, half)
    assert N % tn == 0 and V % tv == 0, ("tiles must divide problem", N, tn, V, tv)
    # Defaults are multiples of 16 (bf16 sublane packing); D % 128 == 0 is preferred
    # for the MXU contraction dim but not required (D is a full-extent block dim).
    assert tn % 8 == 0 and tv % 128 == 0, (tn, tv)

    y = y.astype(jnp.int32)
    xb = x.astype(jnp.bfloat16)
    if prepared is None:
        prepared = prepare_weights(weight)
    wtb, colsum = prepared

    # O(N*D) terms hoisted out of the vocab loop (bf16 inputs, f32 accumulation):
    #   z_i = gold-class logit = x_i . W[y_i]
    #   s_i = sum_v logits_iv  = x_i . sum_v W_v
    w_rows = jnp.take(weight, y, axis=0).astype(jnp.bfloat16)             # (N, D)
    z = jnp.einsum("nd,nd->n", xb, w_rows,
                   preferred_element_type=jnp.float32)[:, None]           # (N, 1)
    s = jnp.einsum("nd,dk->nk", xb, colsum,
                   preferred_element_type=jnp.float32)                    # (N, 1)

    kernel = functools.partial(_smpred_kernel,
                               n_words=float(V),
                               label_smoothing=float(label_smoothing))

    cp_kwargs = dict(dimension_semantics=("parallel", "arbitrary"))
    if vmem_limit_bytes is not None:
        cp_kwargs["vmem_limit_bytes"] = int(vmem_limit_bytes)

    # TODO(synk): for very large D (>= 8k) add a K grid axis over D with a (tn, tv)
    # f32 VMEM logits accumulator so tn/tv need not shrink with D.
    per_row = pl.pallas_call(
        kernel,
        out_shape=jax.ShapeDtypeStruct((N, 1), jnp.float32),
        grid_spec=pltpu.PrefetchScalarGridSpec(
            num_scalar_prefetch=0,
            grid=(N // tn, V // tv),
            in_specs=[
                pl.BlockSpec((tn, D), lambda i, j: (i, 0)),   # x tile (bf16), resident over j
                pl.BlockSpec((D, tv), lambda i, j: (0, j)),   # W^T tile (bf16), streamed
                pl.BlockSpec((tn, 1), lambda i, j: (i, 0)),   # gold logit z
                pl.BlockSpec((tn, 1), lambda i, j: (i, 0)),   # logit sum s
            ],
            out_specs=pl.BlockSpec((tn, 1), lambda i, j: (i, 0)),
            scratch_shapes=[pltpu.VMEM((tn, LANE), jnp.float32)] * 2,    # lane-wide m, l
        ),
        compiler_params=pltpu.CompilerParams(**cp_kwargs),
    )(xb, wtb, z, s)

    # TODO(synk): smoothed_softmax_cross_entropy_with_logits is not shown in the module;
    # (1-eps)*NLL + (eps/V)*sum(-log p) with a mean over tokens is assumed.
    return jnp.mean(per_row)


def smpred_loss_ref(x, weight, y, *, label_smoothing):
    """Pure-JAX reference with the same bf16-rounded matmul inputs."""
    xb = x.astype(jnp.bfloat16).astype(jnp.float32)
    wb = weight.astype(jnp.bfloat16).astype(jnp.float32)
    logits = xb @ wb.T
    logp = jax.nn.log_softmax(logits, axis=-1)
    nll = -jnp.take_along_axis(logp, y[:, None].astype(jnp.int32), axis=-1)[:, 0]
    smooth = -jnp.sum(logp, axis=-1)
    V = logits.shape[-1]
    eps = label_smoothing
    return jnp.mean((1.0 - eps) * nll + (eps / V) * smooth)


if __name__ == "__main__":
    # small shapes consistent with the module: batch=2, seq=8, model_dim=32, vocab=512
    batch, seq, dim, vocab = 2, 8, 32, 512
    pad_index = 1
    label_smoothing = 0.1
    N = batch * seq

    key = jax.random.PRNGKey(0)
    kx, kw, ky = jax.random.split(key, 3)

    x = jax.random.normal(kx, (N, dim), dtype=jnp.float32)
    # deterministic Linear(dim, vocab, bias=False) weight, PyTorch layout (vocab, dim)
    weight = jax.random.normal(kw, (vocab, dim), dtype=jnp.float32) * (1.0 / jnp.sqrt(dim))
    y = jax.random.randint(ky, (N,), 0, vocab, dtype=jnp.int32)
    # mirror the `assert (y == pad_index).sum() == 0`
    y = jnp.where(y == pad_index, y + 1, y)
    assert int(jnp.sum(y == pad_index)) == 0

    prepared = prepare_weights(weight)  # hoistable one-time weight preprocessing
    loss = smpred_loss(x, weight, y, label_smoothing=label_smoothing, prepared=prepared)
    loss = jax.block_until_ready(loss)

    ref = smpred_loss_ref(x, weight, y, label_smoothing=label_smoothing)
    assert jnp.allclose(loss, ref, rtol=1e-3, atol=1e-3), (loss, ref)

    print("KERNEL_OK")
</pallas_src>

<mosaic_0001>
module attributes {stable_mosaic.version = 11 : i64} {
  func.func @_smpred_kernel(%arg0: i32, %arg1: i32, %arg2: memref<16x32xbf16, #tpu.memory_space<vmem>>, %arg3: memref<32x512xbf16, #tpu.memory_space<vmem>>, %arg4: memref<16x1xf32, #tpu.memory_space<vmem>>, %arg5: memref<16x1xf32, #tpu.memory_space<vmem>>, %arg6: memref<16x1xf32, #tpu.memory_space<vmem>>, %arg7: memref<16x128xf32, #tpu.memory_space<vmem>>, %arg8: memref<16x128xf32, #tpu.memory_space<vmem>>) attributes {dimension_semantics = [#tpu.dimension_semantics<parallel>, #tpu.dimension_semantics<arbitrary>], iteration_bounds = array<i64: 1, 1>, scalar_prefetch = 0 : i64, scratch_operands = 2 : i64, tpu.core_type = #tpu.core_type<tc>, window_params = [{transform_indices = @transform_0, window_bounds = array<i64: 16, 32>}, {transform_indices = @transform_1, window_bounds = array<i64: 32, 512>}, {transform_indices = @transform_2, window_bounds = array<i64: 16, 1>}, {transform_indices = @transform_3, window_bounds = array<i64: 16, 1>}, {transform_indices = @transform_4, window_bounds = array<i64: 16, 1>}]} {
    %c0_i32 = arith.constant 0 : i32
    %0 = arith.cmpi eq, %arg1, %c0_i32 : i32
    %1 = arith.extui %0 : i1 to i32
    %c0_i32_0 = arith.constant 0 : i32
    %2 = arith.cmpi ne, %1, %c0_i32_0 : i32
    scf.if %2 {
      %cst_14 = arith.constant 0xFF800000 : f32
      %40 = vector.broadcast %cst_14 : f32 to vector<16x128xf32>
      %c0_15 = arith.constant 0 : index
      %c0_16 = arith.constant 0 : index
      %41 = vector.load %arg7[%c0_15, %c0_16] : memref<16x128xf32, #tpu.memory_space<vmem>>, vector<16x128xf32>
      tpu.vector_store %arg7[%c0_15, %c0_16], %40 {strides = array<i32>} : memref<16x128xf32, #tpu.memory_space<vmem>>, vector<16x128xf32>,
      %cst_17 = arith.constant 0.000000e+00 : f32
      %42 = vector.broadcast %cst_17 : f32 to vector<16x128xf32>
      %c0_18 = arith.constant 0 : index
      %c0_19 = arith.constant 0 : index
      %43 = vector.load %arg8[%c0_18, %c0_19] : memref<16x128xf32, #tpu.memory_space<vmem>>, vector<16x128xf32>
      tpu.vector_store %arg8[%c0_18, %c0_19], %42 {strides = array<i32>} : memref<16x128xf32, #tpu.memory_space<vmem>>, vector<16x128xf32>,
    } else {
    }
    %c0 = arith.constant 0 : index
    %c0_1 = arith.constant 0 : index
    %3 = vector.load %arg2[%c0, %c0_1] : memref<16x32xbf16, #tpu.memory_space<vmem>>, vector<16x32xbf16>
    %c0_2 = arith.constant 0 : index
    %c0_3 = arith.constant 0 : index
    %4 = vector.load %arg3[%c0_2, %c0_3] : memref<32x512xbf16, #tpu.memory_space<vmem>>, vector<32x512xbf16>
    %cst = arith.constant dense<0.000000e+00> : vector<16x512xf32>
    %5 = tpu.matmul %3, %4, %cst {dimension_numbers = #tpu.dot_dimension_numbers<[1], [0], [0], [1], [0, 0, 1, 1], [], []>} : vector<16x32xbf16>, vector<32x512xbf16>, vector<16x512xf32> -> vector<16x512xf32>
    %c0_4 = arith.constant 0 : index
    %c0_5 = arith.constant 0 : index
    %6 = vector.load %arg7[%c0_4, %c0_5] : memref<16x128xf32, #tpu.memory_space<vmem>>, vector<16x128xf32>
    %7 = vector.extract_strided_slice %5 {offsets = [0, 0], sizes = [16, 128], strides = [1, 1]} : vector<16x512xf32> to vector<16x128xf32>
    %8 = arith.maximumf %6, %7 : vector<16x128xf32>
    %9 = vector.extract_strided_slice %5 {offsets = [0, 128], sizes = [16, 128], strides = [1, 1]} : vector<16x512xf32> to vector<16x128xf32>
    %10 = arith.maximumf %8, %9 : vector<16x128xf32>
    %11 = vector.extract_strided_slice %5 {offsets = [0, 256], sizes = [16, 128], strides = [1, 1]} : vector<16x512xf32> to vector<16x128xf32>
    %12 = arith.maximumf %10, %11 : vector<16x128xf32>
    %13 = vector.extract_strided_slice %5 {offsets = [0, 384], sizes = [16, 128], strides = [1, 1]} : vector<16x512xf32> to vector<16x128xf32>
    %14 = arith.maximumf %12, %13 : vector<16x128xf32>
    %c0_6 = arith.constant 0 : index
    %c0_7 = arith.constant 0 : index
    %15 = vector.load %arg8[%c0_6, %c0_7] : memref<16x128xf32, #tpu.memory_space<vmem>>, vector<16x128xf32>
    %16 = arith.subf %6, %14 : vector<16x128xf32>
    %17 = math.exp %16 : vector<16x128xf32>
    %18 = arith.mulf %15, %17 : vector<16x128xf32>
    %19 = vector.extract_strided_slice %5 {offsets = [0, 0], sizes = [16, 128], strides = [1, 1]} : vector<16x512xf32> to vector<16x128xf32>
    %20 = arith.subf %19, %14 : vector<16x128xf32>
    %21 = math.exp %20 : vector<16x128xf32>
    %22 = arith.addf %18, %21 : vector<16x128xf32>
    %23 = vector.extract_strided_slice %5 {offsets = [0, 128], sizes = [16, 128], strides = [1, 1]} : vector<16x512xf32> to vector<16x128xf32>
    %24 = arith.subf %23, %14 : vector<16x128xf32>
    %25 = math.exp %24 : vector<16x128xf32>
    %26 = arith.addf %22, %25 : vector<16x128xf32>
    %27 = vector.extract_strided_slice %5 {offsets = [0, 256], sizes = [16, 128], strides = [1, 1]} : vector<16x512xf32> to vector<16x128xf32>
    %28 = arith.subf %27, %14 : vector<16x128xf32>
    %29 = math.exp %28 : vector<16x128xf32>
    %30 = arith.addf %26, %29 : vector<16x128xf32>
    %31 = vector.extract_strided_slice %5 {offsets = [0, 384], sizes = [16, 128], strides = [1, 1]} : vector<16x512xf32> to vector<16x128xf32>
    %32 = arith.subf %31, %14 : vector<16x128xf32>
    %33 = math.exp %32 : vector<16x128xf32>
    %34 = arith.addf %30, %33 : vector<16x128xf32>
    %c0_8 = arith.constant 0 : index
    %c0_9 = arith.constant 0 : index
    %35 = vector.load %arg8[%c0_8, %c0_9] : memref<16x128xf32, #tpu.memory_space<vmem>>, vector<16x128xf32>
    tpu.vector_store %arg8[%c0_8, %c0_9], %34 {strides = array<i32>} : memref<16x128xf32, #tpu.memory_space<vmem>>, vector<16x128xf32>,
    %c0_10 = arith.constant 0 : index
    %c0_11 = arith.constant 0 : index
    %36 = vector.load %arg7[%c0_10, %c0_11] : memref<16x128xf32, #tpu.memory_space<vmem>>, vector<16x128xf32>
    tpu.vector_store %arg7[%c0_10, %c0_11], %14 {strides = array<i32>} : memref<16x128xf32, #tpu.memory_space<vmem>>, vector<16x128xf32>,
    %c0_i32_12 = arith.constant 0 : i32
    %37 = arith.cmpi eq, %arg1, %c0_i32_12 : i32
    %38 = arith.extui %37 : i1 to i32
    %c0_i32_13 = arith.constant 0 : i32
    %39 = arith.cmpi ne, %38, %c0_i32_13 : i32
    scf.if %39 {
      %c0_14 = arith.constant 0 : index
      %c0_15 = arith.constant 0 : index
      %40 = vector.load %arg7[%c0_14, %c0_15] : memref<16x128xf32, #tpu.memory_space<vmem>>, vector<16x128xf32>
      %c0_16 = arith.constant 0 : index
      %c0_17 = arith.constant 0 : index
      %41 = vector.load %arg8[%c0_16, %c0_17] : memref<16x128xf32, #tpu.memory_space<vmem>>, vector<16x128xf32>
      %cst_18 = arith.constant dense<0xFF800000> : vector<16xf32>
      %42 = vector.multi_reduction <maximumf>, %40, %cst_18 [1] : vector<16x128xf32> to vector<16xf32>
      %43 = vector.shape_cast %42 : vector<16xf32> to vector<16x1xf32>
      %44 = vector.broadcast %43 : vector<16x1xf32> to vector<16x128xf32>
      %45 = arith.subf %40, %44 : vector<16x128xf32>
      %46 = math.exp %45 : vector<16x128xf32>
      %47 = arith.mulf %41, %46 : vector<16x128xf32>
      %cst_19 = arith.constant dense<0.000000e+00> : vector<16xf32>
      %48 = vector.multi_reduction <add>, %47, %cst_19 [1] : vector<16x128xf32> to vector<16xf32>
      %49 = vector.shape_cast %48 : vector<16xf32> to vector<16x1xf32>
      %50 = math.log %49 : vector<16x1xf32>
      %51 = arith.addf %43, %50 : vector<16x1xf32>
      %c0_20 = arith.constant 0 : index
      %c0_21 = arith.constant 0 : index
      %52 = vector.load %arg4[%c0_20, %c0_21] : memref<16x1xf32, #tpu.memory_space<vmem>>, vector<16x1xf32>
      %53 = arith.subf %51, %52 : vector<16x1xf32>
      %cst_22 = arith.constant 5.120000e+02 : f32
      %54 = vector.broadcast %cst_22 : f32 to vector<16x1xf32>
      %55 = arith.mulf %54, %51 : vector<16x1xf32>
      %c0_23 = arith.constant 0 : index
      %c0_24 = arith.constant 0 : index
      %56 = vector.load %arg5[%c0_23, %c0_24] : memref<16x1xf32, #tpu.memory_space<vmem>>, vector<16x1xf32>
      %57 = arith.subf %55, %56 : vector<16x1xf32>
      %cst_25 = arith.constant 0.899999976 : f32
      %58 = vector.broadcast %cst_25 : f32 to vector<16x1xf32>
      %59 = arith.mulf %58, %53 : vector<16x1xf32>
      %cst_26 = arith.constant 1.95312503E-4 : f32
      %60 = vector.broadcast %cst_26 : f32 to vector<16x1xf32>
      %61 = arith.mulf %60, %57 : vector<16x1xf32>
      %62 = arith.addf %59, %61 : vector<16x1xf32>
      %c0_27 = arith.constant 0 : index
      %c0_28 = arith.constant 0 : index
      %63 = vector.load %arg6[%c0_27, %c0_28] : memref<16x1xf32, #tpu.memory_space<vmem>>, vector<16x1xf32>
      tpu.vector_store %arg6[%c0_27, %c0_28], %62 {strides = array<i32>} : memref<16x1xf32, #tpu.memory_space<vmem>>, vector<16x1xf32>,
    } else {
    }
    return
  }
  func.func @transform_0(%arg0: i32, %arg1: i32) -> (i32, i32) {
    %c0_i32 = arith.constant 0 : i32
    %c0_i32_0 = arith.constant 0 : i32
    return %arg0, %c0_i32 : i32, i32
  }
  func.func @transform_1(%arg0: i32, %arg1: i32) -> (i32, i32) {
    %c0_i32 = arith.constant 0 : i32
    %c0_i32_0 = arith.constant 0 : i32
    return %c0_i32, %arg1 : i32, i32
  }
  func.func @transform_2(%arg0: i32, %arg1: i32) -> (i32, i32) {
    %c0_i32 = arith.constant 0 : i32
    %c0_i32_0 = arith.constant 0 : i32
    return %arg0, %c0_i32 : i32, i32
  }
  func.func @transform_3(%arg0: i32, %arg1: i32) -> (i32, i32) {
    %c0_i32 = arith.constant 0 : i32
    %c0_i32_0 = arith.constant 0 : i32
    return %arg0, %c0_i32 : i32, i32
  }
  func.func @transform_4(%arg0: i32, %arg1: i32) -> (i32, i32) {
    %c0_i32 = arith.constant 0 : i32
    %c0_i32_0 = arith.constant 0 : i32
    return %arg0, %c0_i32 : i32, i32
  }
}

</mosaic_0001>

<llo_original>
// kernel: tpu_custom_call.1
$region0: #{tpu_custom_call.1}
  #allocation0 [shape = 'u32[]', space=smem, size = 0x4, offset = 0x4, fixed_abs, tag = 'smem constant byte address 0x4 - core index']
  #allocation1 [shape = 'u32[144,128]{1,0:T(1,128)}', space=vmem, size = 0x12000, scoped, tag = 'internal scratch']
  #allocation2 [shape = 'f32[16,128]{1,0:T(8,128)}', space=vmem, size = 0x2000, scoped, tag = 'scratch operand']
  #allocation3 [shape = 'f32[16,128]{1,0:T(8,128)}', space=vmem, size = 0x2000, scoped, tag = 'scratch operand']
  %s0 = inlined_call_operand.vmem [shape: bf16[16,32], index: 0, kind: input, shape index: {}]
  %s1 = inlined_call_operand.hbm [shape: bf16[32,512], index: 1, kind: input, shape index: {}]
  %s2 = inlined_call_operand.vmem [shape: f32[16,1], index: 2, kind: input, shape index: {}]
  %s3 = inlined_call_operand.vmem [shape: f32[16,1], index: 3, kind: input, shape index: {}]
  %s4 = inlined_call_operand.vmem [shape: f32[16,1], index: 4, kind: output, shape index: {}]
  %s5 = sld [smem:[#allocation0]]
  $region38: #{tpu_custom_call.1} parent=0
    _
  %s7 = ssub.s32 1, %s5
  %s8 = scalar_select 0, %s7, %s5
  $region1: #{tpu_custom_call.1} parent=0
    #allocation4 [shape = 'u8[32768]{0}', space=vmem, size = 0x8000, scoped, tag = 'input window, operand 1, single buffered']
    #allocation5 [shape = 's32[1]{0}', space=sflag, size = 0x4, scoped, tag = 'scoped memory for tpu_custom_call.1']
    %9 = vsyncpa [#allocation5], 0
    // Predicated region
    $region2: #{tpu_custom_call.1} parent=1 // pred_check
      _
    $region3: #{tpu_custom_call.1} parent=1 // pred_check_branch
      %11 = sbr.rel (0) target = $region5
    $region4: #{tpu_custom_call.1} parent=1 // pred_region
      _
    $region5: #{tpu_custom_call.1} parent=1 // pred_fallthru
      _
    // Predicated region
    $region6: #{tpu_custom_call.1} parent=1 // pred_check
      _
    $region7: #{tpu_custom_call.1} parent=1 // pred_check_branch
      %13 = sbr.rel (0) target = $region9
    $region8: #{tpu_custom_call.1} parent=1 // pred_region
      %s15 = ssub.s32 1024, 1024
      %16 = vsyncadd [#allocation5], %s15
      %s17 = sshll.u32 [#allocation4], 4
      %s18 = int_to_ptr.vmem [resolvable:$true] %s17
      %23 = dma.hbm_to_vmem [thread:$0]  %s1, 1024, %s18, [#allocation5], 256, 256, 16
    $region9: #{tpu_custom_call.1} parent=1 // pred_fallthru
      _
    // Predicated region
    $region10: #{tpu_custom_call.1} parent=1 // pred_check
      _
    $region11: #{tpu_custom_call.1} parent=1 // pred_check_branch
      %25 = sbr.rel (0) target = $region13
    $region12: #{tpu_custom_call.1} parent=1 // pred_region
      _
    $region13: #{tpu_custom_call.1} parent=1 // pred_fallthru
      _
    // Predicated region
    $region14: #{tpu_custom_call.1} parent=1 // pred_check
      _
    $region15: #{tpu_custom_call.1} parent=1 // pred_check_branch
      %27 = sbr.rel (0) target = $region17
    $region16: #{tpu_custom_call.1} parent=1 // pred_region
      _
    $region17: #{tpu_custom_call.1} parent=1 // pred_fallthru
      _
    // Predicated region
    $region18: #{tpu_custom_call.1} parent=1 // pred_check
      _
    $region19: #{tpu_custom_call.1} parent=1 // pred_check_branch
      %29 = sbr.rel (0) target = $region21
    $region20: #{tpu_custom_call.1} parent=1 // pred_region
      %30 = dma.done [#allocation5], 1024
    $region21: #{tpu_custom_call.1} parent=1 // pred_fallthru
      _
    %p32 = scmp.eq.s32.totalorder 0, 0
    // Predicated region
    $region22: #{tpu_custom_call.1} parent=1 // pred_check
      %p33 = pneg %p32
    $region23: #{tpu_custom_call.1} parent=1 // pred_check_branch
      %35 = sbr.rel (%p33) target = $region25
    $region24: #{tpu_custom_call.1} parent=1 // pred_region
      %36 = vst [vmem:[#allocation2] sm:$0xff] -inf
      %37 = vst [vmem:[#allocation2 + $0x8] sm:$0xff] -inf
      %38 = vst [vmem:[#allocation3] sm:$0xff] 0.0
      %39 = vst [vmem:[#allocation3 + $0x8] sm:$0xff] 0.0
    $region25: #{tpu_custom_call.1} parent=1 // pred_fallthru
      _
    %v40 = vld [vmem:[%s0] sm:$0xf]
    %v41 = vld [vmem:[%s0 + $0x4] sm:$0xf]
    %v42 = vld [vmem:[#allocation4] sm:$0xff]
    %v43 = vld [vmem:[#allocation4 + $0x8] sm:$0xff]
    %v44 = vld [vmem:[#allocation4 + $0x10] sm:$0xff]
    %v45 = vld [vmem:[#allocation4 + $0x18] sm:$0xff]
    %v46 = vld [vmem:[#allocation4 + $0x20] sm:$0xff]
    %v47 = vld [vmem:[#allocation4 + $0x28] sm:$0xff]
    %v48 = vld [vmem:[#allocation4 + $0x30] sm:$0xff]
    %v49 = vld [vmem:[#allocation4 + $0x38] sm:$0xff]
    %v52 = vunpack.c.l.b16 %v40
    %v53 = vunpack.c.l.b16 %v41
    %v54 = vpack.c.b16 %v53, %v52
    %v63 = vunpack.c.l.b16 %v42
    %v64 = vunpack.c.h.b16 %v42
    %v65 = vunpack.c.l.b16 %v43
    %v66 = vunpack.c.h.b16 %v43
    %v67 = vunpack.c.l.b16 %v44
    %v68 = vunpack.c.h.b16 %v44
    %v69 = vunpack.c.l.b16 %v45
    %v70 = vunpack.c.h.b16 %v45
    %v71 = vunpack.c.l.b16 %v46
    %v72 = vunpack.c.h.b16 %v46
    %v73 = vunpack.c.l.b16 %v47
    %v74 = vunpack.c.h.b16 %v47
    %v75 = vunpack.c.l.b16 %v48
    %v76 = vunpack.c.h.b16 %v48
    %v77 = vunpack.c.l.b16 %v49
    %v78 = vunpack.c.h.b16 %v49
    %v79 = vpack.c.b16 %v67, %v63
    %v80 = vpack.c.b16 %v68, %v64
    %v81 = vpack.c.b16 %v69, %v65
    %v82 = vpack.c.b16 %v70, %v66
    %v83 = vpack.c.b16 %v75, %v71
    %v84 = vpack.c.b16 %v76, %v72
    %v85 = vpack.c.b16 %v77, %v73
    %v86 = vpack.c.b16 %v78, %v74
    %vm95 = vcmask 261120
    %v97 = vsel %vm95, %v54, 0
    %99 = vmatprep.subr.bf16.mxu0 0
    %100 = vmatpush1.bf16.msra.mxu0 0
    %101 = vmatprep.subr.bf16.mxu0 0
    %102 = vmatpush1.bf16.msra.mxu0 0
    %103 = vmatprep.subr.bf16.mxu0 0
    %104 = vmatpush1.bf16.msra.mxu0 0
    %105 = vmatprep.subr.bf16.mxu0 0
    %106 = vmatpush1.bf16.msra.mxu0 0
    %107 = vmatprep.subr.bf16.mxu0 0
    %108 = vmatpush1.bf16.msra.mxu0 0
    %109 = vmatprep.subr.bf16.mxu0 0
    %110 = vmatpush1.bf16.msra.mxu0 0
    %111 = vmatprep.subr.bf16.mxu0 %v84
    %112 = vmatpush1.bf16.msra.mxu0 %v83
    %113 = vmatprep.subr.bf16.mxu0 %v80
    %114 = vmatpush1.bf16.msra.mxu0 %v79
    %115 = vmatprep.subr.bf16.mxu0 0
    %116 = vmatpush2.bf16.msra.mxu0 0
    %117 = vmatprep.subr.bf16.mxu0 0
    %118 = vmatpush2.bf16.msra.mxu0 0
    %119 = vmatprep.subr.bf16.mxu0 0
    %120 = vmatpush2.bf16.msra.mxu0 0
    %121 = vmatprep.subr.bf16.mxu0 0
    %122 = vmatpush2.bf16.msra.mxu0 0
    %123 = vmatprep.subr.bf16.mxu0 0
    %124 = vmatpush2.bf16.msra.mxu0 0
    %125 = vmatprep.subr.bf16.mxu0 0
    %126 = vmatpush2.bf16.msra.mxu0 0
    %127 = vmatprep.subr.bf16.mxu0 0
    %128 = vmatpush2.bf16.msra.mxu0 0
    %129 = vmatprep.subr.bf16.mxu0 0
    %130 = vmatpush2.bf16.msra.mxu0 0
    %131 = vmatprep.mubr.bf16.mxu0 0
    %132 = vmatmul.mubr.bf16.gmra.mxu0 %v97
    %v133 = vpop.f32.mrf.mxu0
    %v134 = vadd.f32 0.0, %v133
    %v135 = vpop.f32.mrf.mxu0
    %v136 = vadd.f32 0.0, %v135
    %v137 = vpop.f32.mrf.mxu0
    %v138 = vadd.f32 0.0, %v137
    %v139 = vpop.f32.mrf.mxu0
    %v140 = vadd.f32 0.0, %v139
    %141 = vdwg.mxu0
    %142 = vmatprep.subr.bf16.mxu0 0
    %143 = vmatpush1.bf16.msra.mxu0 0
    %144 = vmatprep.subr.bf16.mxu0 0
    %145 = vmatpush1.bf16.msra.mxu0 0
    %146 = vmatprep.subr.bf16.mxu0 0
    %147 = vmatpush1.bf16.msra.mxu0 0
    %148 = vmatprep.subr.bf16.mxu0 0
    %149 = vmatpush1.bf16.msra.mxu0 0
    %150 = vmatprep.subr.bf16.mxu0 0
    %151 = vmatpush1.bf16.msra.mxu0 0
    %152 = vmatprep.subr.bf16.mxu0 0
    %153 = vmatpush1.bf16.msra.mxu0 0
    %154 = vmatprep.subr.bf16.mxu0 %v86
    %155 = vmatpush1.bf16.msra.mxu0 %v85
    %156 = vmatprep.subr.bf16.mxu0 %v82
    %157 = vmatpush1.bf16.msra.mxu0 %v81
    %158 = vmatprep.subr.bf16.mxu0 0
    %159 = vmatpush2.bf16.msra.mxu0 0
    %160 = vmatprep.subr.bf16.mxu0 0
    %161 = vmatpush2.bf16.msra.mxu0 0
    %162 = vmatprep.subr.bf16.mxu0 0
    %163 = vmatpush2.bf16.msra.mxu0 0
    %164 = vmatprep.subr.bf16.mxu0 0
    %165 = vmatpush2.bf16.msra.mxu0 0
    %166 = vmatprep.subr.bf16.mxu0 0
    %167 = vmatpush2.bf16.msra.mxu0 0
    %168 = vmatprep.subr.bf16.mxu0 0
    %169 = vmatpush2.bf16.msra.mxu0 0
    %170 = vmatprep.subr.bf16.mxu0 0
    %171 = vmatpush2.bf16.msra.mxu0 0
    %172 = vmatprep.subr.bf16.mxu0 0
    %173 = vmatpush2.bf16.msra.mxu0 0
    %174 = vmatprep.mubr.bf16.mxu0 0
    %175 = vmatmul.mubr.bf16.gmra.mxu0 %v97
    %v176 = vpop.f32.mrf.mxu0
    %v177 = vadd.f32 0.0, %v176
    %v178 = vpop.f32.mrf.mxu0
    %v179 = vadd.f32 0.0, %v178
    %v180 = vpop.f32.mrf.mxu0
    %v181 = vadd.f32 0.0, %v180
    %v182 = vpop.f32.mrf.mxu0
    %v183 = vadd.f32 0.0, %v182
    %184 = vdwg.mxu0
    %v185 = vld [vmem:[#allocation2] sm:$0xff]
    %v186 = vld [vmem:[#allocation2 + $0x8] sm:$0xff]
    %v187 = vmax.f32 %v185, %v134
    %v188 = vmax.f32 %v186, %v138
    %v189 = vmax.f32 %v187, %v136
    %v190 = vmax.f32 %v188, %v140
    %v191 = vmax.f32 %v189, %v177
    %v192 = vmax.f32 %v190, %v181
    %v193 = vmax.f32 %v191, %v179
    %v194 = vmax.f32 %v192, %v183
    %v195 = vld [vmem:[#allocation3] sm:$0xff]
    %v196 = vld [vmem:[#allocation3 + $0x8] sm:$0xff]
    %v197 = vsub.f32 %v185, %v193
    %v198 = vsub.f32 %v186, %v194
    %v199 = vmul.f32 %v197, 1.442695
    %v200 = vpow.pop %v199
    %v201 = vmul.f32 %v198, 1.442695
    %v202 = vpow.pop %v201
    %v203 = vmul.f32 %v195, %v200
    %v204 = vmul.f32 %v196, %v202
    %v205 = vsub.f32 %v134, %v193
    %v206 = vsub.f32 %v138, %v194
    %v207 = vmul.f32 %v205, 1.442695
    %v208 = vpow.pop %v207
    %v209 = vmul.f32 %v206, 1.442695
    %v210 = vpow.pop %v209
    %v211 = vadd.f32 %v203, %v208
    %v212 = vadd.f32 %v204, %v210
    %v213 = vsub.f32 %v136, %v193
    %v214 = vsub.f32 %v140, %v194
    %v215 = vmul.f32 %v213, 1.442695
    %v216 = vpow.pop %v215
    %v217 = vmul.f32 %v214, 1.442695
    %v218 = vpow.pop %v217
    %v219 = vadd.f32 %v211, %v216
    %v220 = vadd.f32 %v212, %v218
    %v221 = vsub.f32 %v177, %v193
    %v222 = vsub.f32 %v181, %v194
    %v223 = vmul.f32 %v221, 1.442695
    %v224 = vpow.pop %v223
    %v225 = vmul.f32 %v222, 1.442695
    %v226 = vpow.pop %v225
    %v227 = vadd.f32 %v219, %v224
    %v228 = vadd.f32 %v220, %v226
    %v229 = vsub.f32 %v179, %v193
    %v230 = vsub.f32 %v183, %v194
    %v231 = vmul.f32 %v229, 1.442695
    %v232 = vpow.pop %v231
    %v233 = vmul.f32 %v230, 1.442695
    %v234 = vpow.pop %v233
    %v235 = vadd.f32 %v227, %v232
    %v236 = vadd.f32 %v228, %v234
    %237 = vst [vmem:[#allocation3] sm:$0xff] %v235
    %238 = vst [vmem:[#allocation3 + $0x8] sm:$0xff] %v236
    %239 = vst [vmem:[#allocation2] sm:$0xff] %v193
    %240 = vst [vmem:[#allocation2 + $0x8] sm:$0xff] %v194
    // Predicated region
    $region26: #{tpu_custom_call.1} parent=1 // pred_check
      %p241 = pneg %p32
    $region27: #{tpu_custom_call.1} parent=1 // pred_check_branch
      %243 = sbr.rel (%p241) target = $region29
    $region28: #{tpu_custom_call.1} parent=1 // pred_region
      %v244 = vld [vmem:[#allocation2] sm:$0xff]
      %v245 = vld [vmem:[#allocation2 + $0x8] sm:$0xff]
      %v246 = vld [vmem:[#allocation3] sm:$0xff]
      %v247 = vld [vmem:[#allocation3 + $0x8] sm:$0xff]
      %248 = vmax.xlane.f32.xlu0 %v244
      %v249 = vpop.xlane.xlu0 %248
      %250 = vmax.xlane.f32.xlu0 %v245
      %v251 = vpop.xlane.xlu0 %250
      %v252 = vsub.f32 %v244, %v249
      %v253 = vsub.f32 %v245, %v251
      %v254 = vmul.f32 %v252, 1.442695
      %v255 = vpow.pop %v254
      %v256 = vmul.f32 %v253, 1.442695
      %v257 = vpow.pop %v256
      %v258 = vmul.f32 %v246, %v255
      %v259 = vmul.f32 %v247, %v257
      %260 = vadd.xlane.f32.xlu0 %v258
      %v261 = vpop.xlane.xlu0 %260
      %262 = vadd.xlane.f32.xlu0 %v259
      %v263 = vpop.xlane.xlu0 %262
      %v264 = vlog2.pop %v261
      %v265 = vmul.f32 %v264, 0.6931472
      %v266 = vlog2.pop %v263
      %v267 = vmul.f32 %v266, 0.6931472
      %v268 = vadd.f32 %v249, %v265
      %v269 = vadd.f32 %v251, %v267
      %v270 = vld [vmem:[%s2] sm:$0xff]
      %v271 = vld [vmem:[%s2 + $0x8] sm:$0xff]
      %v272 = vsub.f32 %v268, %v270
      %v273 = vsub.f32 %v269, %v271
      %v274 = vmul.f32 %v268, 512.0
      %v275 = vmul.f32 %v269, 512.0
      %v276 = vld [vmem:[%s3] sm:$0xff]
      %v277 = vld [vmem:[%s3 + $0x8] sm:$0xff]
      %v278 = vsub.f32 %v274, %v276
      %v279 = vsub.f32 %v275, %v277
      %v280 = vmul.f32 %v272, 0.9
      %v281 = vmul.f32 %v273, 0.9
      %v282 = vmul.f32 %v278, 0.0001953125
      %v283 = vmul.f32 %v279, 0.0001953125
      %v284 = vadd.f32 %v280, %v282
      %v285 = vadd.f32 %v281, %v283
      %vm286 = vcmask 7168
      %287 = vst.msk [vmem:[%s4] sm:$0xff] %vm286, %v284
      %288 = vst.msk [vmem:[%s4 + $0x8] sm:$0xff] %vm286, %v285
    $region29: #{tpu_custom_call.1} parent=1 // pred_fallthru
      _
    // Predicated region
    $region30: #{tpu_custom_call.1} parent=1 // pred_check
      _
    $region31: #{tpu_custom_call.1} parent=1 // pred_check_branch
      %290 = sbr.rel (0) target = $region33
    $region32: #{tpu_custom_call.1} parent=1 // pred_region
      _
    $region33: #{tpu_custom_call.1} parent=1 // pred_fallthru
      _
    // Predicated region
    $region34: #{tpu_custom_call.1} parent=1 // pred_check
      _
    $region35: #{tpu_custom_call.1} parent=1 // pred_check_branch
      %292 = sbr.rel (0) target = $region37
    $region36: #{tpu_custom_call.1} parent=1 // pred_region
      _
    $region37: #{tpu_custom_call.1} parent=1 // pred_fallthru
      _
    %293 = vsyncpa [#allocation5], 1

</llo_original>
